<compile_context>
chip_gen: v5e
topology: v5e:2x2
jax: 0.10.0
libtpu: 0.0.40
codegen_flags: <defaults>
</compile_context>

<pallas_src>
import functools

import jax
import jax.numpy as jnp
from jax.experimental import pallas as pl


# ----------------------------- fused Pallas kernel ---------------------------

def gcn_fused_kernel(a_ref, p_ref, x_ref,
                     w1_ref, b1_ref,
                     wl_ref, bl_ref,
                     l1w_ref, l1b_ref,
                     l2w_ref, l2b_ref,
                     o_ref, *, num_hidden_layers, num_classes):
    f32 = jnp.float32
    neg = jnp.float32(-1e30)

    a = a_ref[...]                                              # bf16 [N, N]

    # ---- conv1: relu((A_hat @ X) @ W1 + b1)  (reordered: F_in < F_out) ----
    ax = jnp.dot(a, x_ref[...], preferred_element_type=f32)     # [N, Fp] f32
    z = jnp.dot(ax.astype(a.dtype), w1_ref[...],
                preferred_element_type=f32)
    h = jnp.maximum(z + b1_ref[...], 0.0)                       # f32 [N, H]

    # ---- remaining convs: relu(A_hat @ (H @ Wl) + bl) ----------------------
    for l in range(num_hidden_layers):                          # static unroll
        hw = jnp.dot(h.astype(a.dtype), wl_ref[l],
                     preferred_element_type=f32)
        z = jnp.dot(a, hw.astype(a.dtype), preferred_element_type=f32)
        h = jnp.maximum(z + bl_ref[l], 0.0)

    # ---- global mean pool: P @ H  -> [B, H]  (f32 matmul, tiny) ------------
    g = jnp.dot(p_ref[...], h, preferred_element_type=f32)

    # ---- lin1 + relu --------------------------------------------------------
    z = jnp.dot(g.astype(l1w_ref.dtype), l1w_ref[...],
                preferred_element_type=f32) + l1b_ref[...]
    g = jnp.maximum(z, 0.0)

    # F.dropout(p=0.5, training=False) -> identity at inference.

    # ---- lin2 + masked log_softmax over the real classes --------------------
    z = jnp.dot(g.astype(l2w_ref.dtype), l2w_ref[...],
                preferred_element_type=f32) + l2b_ref[...]      # [B, Cp] f32
    col = jax.lax.broadcasted_iota(jnp.int32, z.shape, 1)
    valid = col < num_classes
    zm = jnp.where(valid, z, neg)
    m = jnp.max(zm, axis=-1, keepdims=True)
    ssum = jnp.sum(jnp.where(valid, jnp.exp(zm - m), 0.0),
                   axis=-1, keepdims=True)
    lse = m + jnp.log(ssum)
    o_ref[...] = zm - lse


# ------------------------------ glue (plain JAX) -----------------------------

def _round_up(x, m):
    return ((x + m - 1) // m) * m


def build_norm_adj(edge_index, num_nodes):
    """Dense D^-1/2 (A + I) D^-1/2, matching torch_geometric gcn_norm.

    Scatter-add over the raw edge_index (duplicate edges add up), matching
    PyG's add-aggregation message passing on an uncoalesced edge list."""
    src, dst = edge_index[0], edge_index[1]
    loop = jnp.arange(num_nodes, dtype=src.dtype)
    src = jnp.concatenate([src, loop])
    dst = jnp.concatenate([dst, loop])
    adj = jnp.zeros((num_nodes, num_nodes), jnp.float32).at[dst, src].add(1.0)
    deg = adj.sum(axis=1)
    dinv = jnp.where(deg > 0, jax.lax.rsqrt(deg), 0.0)
    return dinv[:, None] * adj * dinv[None, :]


def build_pool_matrix(batch, target_size):
    """Row-normalized one-hot graph-membership matrix [B, N] for mean pool."""
    onehot = (batch[None, :] == jnp.arange(target_size)[:, None]).astype(
        jnp.float32)
    counts = jnp.maximum(onehot.sum(axis=1, keepdims=True), 1.0)
    return onehot / counts


def init_params(key, num_features, output_channels, num_layers=3,
                nb_neurons=128):
    keys = jax.random.split(key, 2 * (num_layers + 2))
    ki = iter(keys)

    def glorot(k, fan_in, fan_out):
        lim = jnp.sqrt(6.0 / (fan_in + fan_out))
        return jax.random.uniform(k, (fan_in, fan_out), jnp.float32, -lim, lim)

    params = {}
    params["conv1_w"] = glorot(next(ki), num_features, nb_neurons)
    params["conv1_b"] = jnp.zeros((nb_neurons,), jnp.float32)
    params["convs"] = []
    for _ in range(num_layers - 1):
        w = glorot(next(ki), nb_neurons, nb_neurons)
        b = jnp.zeros((nb_neurons,), jnp.float32)
        params["convs"].append((w, b))
    params["lin1_w"] = glorot(next(ki), nb_neurons, nb_neurons)   # (in, out)
    params["lin1_b"] = 0.01 * jax.random.normal(next(ki), (nb_neurons,))
    params["lin2_w"] = glorot(next(ki), nb_neurons, output_channels)
    params["lin2_b"] = 0.01 * jax.random.normal(next(ki), (output_channels,))
    return params


@functools.partial(jax.jit, static_argnames=("target_size",))
def gcn_forward(params, x, edge_index, batch, target_size):
    n, f = x.shape
    hdim = params["conv1_w"].shape[1]
    cdim = params["lin2_w"].shape[1]
    bf16 = jnp.bfloat16

    a_hat = build_norm_adj(edge_index, n).astype(bf16)           # [N, N]
    pool_mat = build_pool_matrix(batch, target_size)             # [B, N] f32

    # Lane-dense padding of the narrow minor dims (F=8 -> 128, C=4 -> 128).
    f_pad = _round_up(f, 128)
    c_pad = _round_up(cdim, 128)

    x_pad = jnp.pad(x, ((0, 0), (0, f_pad - f))).astype(bf16)
    w1 = jnp.pad(params["conv1_w"], ((0, f_pad - f), (0, 0))).astype(bf16)
    b1 = params["conv1_b"].reshape(1, hdim)

    convs_w = jnp.stack([w for w, _ in params["convs"]]).astype(bf16)
    convs_b = jnp.stack([b.reshape(1, hdim) for _, b in params["convs"]])

    l1w = params["lin1_w"].astype(bf16)
    l1b = params["lin1_b"].reshape(1, hdim)
    l2w = jnp.pad(params["lin2_w"], ((0, 0), (0, c_pad - cdim))).astype(bf16)
    l2b = jnp.pad(params["lin2_b"], (0, c_pad - cdim)).reshape(1, c_pad)

    kernel = functools.partial(gcn_fused_kernel,
                               num_hidden_layers=len(params["convs"]),
                               num_classes=cdim)

    # Everything fits in VMEM as single full-array blocks -> no grid needed;
    # one pallas_call runs the entire forward with all weights resident.
    out_pad = pl.pallas_call(
        kernel,
        out_shape=jax.ShapeDtypeStruct((target_size, c_pad), jnp.float32),
    )(a_hat, pool_mat, x_pad, w1, b1, convs_w, convs_b, l1w, l1b, l2w, l2b)

    return out_pad[:, :cdim]


# ------------------------------------ main ------------------------------------

if __name__ == "__main__":
    key = jax.random.PRNGKey(0)
    k_param, k_x, k_edge = jax.random.split(key, 3)

    num_features = 8
    output_channels = 4
    nb_neurons = 128
    num_nodes = 32
    num_edges = 64
    target_size = 2  # number of graphs in the batch

    params = init_params(k_param, num_features, output_channels,
                         num_layers=3, nb_neurons=nb_neurons)

    x = jax.random.normal(k_x, (num_nodes, num_features), jnp.float32)
    # undirected random edges (both directions), deterministic
    src = jax.random.randint(k_edge, (num_edges,), 0, num_nodes)
    dst = jnp.roll(src, 1)
    edge_index = jnp.stack(
        [jnp.concatenate([src, dst]), jnp.concatenate([dst, src])], axis=0
    ).astype(jnp.int32)
    batch = jnp.concatenate(
        [jnp.zeros((num_nodes // 2,), jnp.int32),
         jnp.ones((num_nodes - num_nodes // 2,), jnp.int32)])

    out = gcn_forward(params, x, edge_index, batch, target_size)
    jax.block_until_ready(out)

    assert out.shape == (target_size, output_channels)
    # rows of log_softmax must sum to 1 in prob space
    assert jnp.allclose(jnp.exp(out).sum(axis=-1), 1.0, atol=1e-4)
    print("KERNEL_OK")
</pallas_src>

<mosaic_0001>
module attributes {stable_mosaic.version = 11 : i64} {
  func.func @gcn_fused_kernel(%arg0: memref<32x32xbf16, #tpu.memory_space<vmem>>, %arg1: memref<2x32xf32, #tpu.memory_space<vmem>>, %arg2: memref<32x128xbf16, #tpu.memory_space<vmem>>, %arg3: memref<128x128xbf16, #tpu.memory_space<vmem>>, %arg4: memref<1x128xf32, #tpu.memory_space<vmem>>, %arg5: memref<2x128x128xbf16, #tpu.memory_space<vmem>>, %arg6: memref<2x1x128xf32, #tpu.memory_space<vmem>>, %arg7: memref<128x128xbf16, #tpu.memory_space<vmem>>, %arg8: memref<1x128xf32, #tpu.memory_space<vmem>>, %arg9: memref<128x128xbf16, #tpu.memory_space<vmem>>, %arg10: memref<1x128xf32, #tpu.memory_space<vmem>>, %arg11: memref<2x128xf32, #tpu.memory_space<vmem>>) attributes {dimension_semantics = [], scalar_prefetch = 0 : i64, scratch_operands = 0 : i64, tpu.core_type = #tpu.core_type<tc>} {
    %c0 = arith.constant 0 : index
    %c0_0 = arith.constant 0 : index
    %0 = vector.load %arg0[%c0, %c0_0] : memref<32x32xbf16, #tpu.memory_space<vmem>>, vector<32x32xbf16>
    %c0_1 = arith.constant 0 : index
    %c0_2 = arith.constant 0 : index
    %1 = vector.load %arg2[%c0_1, %c0_2] : memref<32x128xbf16, #tpu.memory_space<vmem>>, vector<32x128xbf16>
    %cst = arith.constant dense<0.000000e+00> : vector<32x128xf32>
    %2 = tpu.matmul %0, %1, %cst {dimension_numbers = #tpu.dot_dimension_numbers<[1], [0], [0], [1], [0, 0, 1, 1], [], []>} : vector<32x32xbf16>, vector<32x128xbf16>, vector<32x128xf32> -> vector<32x128xf32>
    %3 = arith.truncf %2 : vector<32x128xf32> to vector<32x128xbf16>
    %c0_3 = arith.constant 0 : index
    %c0_4 = arith.constant 0 : index
    %4 = vector.load %arg3[%c0_3, %c0_4] : memref<128x128xbf16, #tpu.memory_space<vmem>>, vector<128x128xbf16>
    %cst_5 = arith.constant dense<0.000000e+00> : vector<32x128xf32>
    %5 = tpu.matmul %3, %4, %cst_5 {dimension_numbers = #tpu.dot_dimension_numbers<[1], [0], [0], [1], [0, 0, 1, 1], [], []>} : vector<32x128xbf16>, vector<128x128xbf16>, vector<32x128xf32> -> vector<32x128xf32>
    %c0_6 = arith.constant 0 : index
    %c0_7 = arith.constant 0 : index
    %6 = vector.load %arg4[%c0_6, %c0_7] : memref<1x128xf32, #tpu.memory_space<vmem>>, vector<1x128xf32>
    %7 = vector.broadcast %6 : vector<1x128xf32> to vector<32x128xf32>
    %8 = arith.addf %5, %7 : vector<32x128xf32>
    %cst_8 = arith.constant 0.000000e+00 : f32
    %9 = vector.broadcast %cst_8 : f32 to vector<32x128xf32>
    %10 = arith.maximumf %8, %9 : vector<32x128xf32>
    %11 = arith.truncf %10 : vector<32x128xf32> to vector<32x128xbf16>
    %c0_9 = arith.constant 0 : index
    %c0_10 = arith.constant 0 : index
    %c0_11 = arith.constant 0 : index
    %12 = vector.load %arg5[%c0_9, %c0_10, %c0_11] : memref<2x128x128xbf16, #tpu.memory_space<vmem>>, vector<1x128x128xbf16>
    %13 = vector.shape_cast %12 : vector<1x128x128xbf16> to vector<128x128xbf16>
    %cst_12 = arith.constant dense<0.000000e+00> : vector<32x128xf32>
    %14 = tpu.matmul %11, %13, %cst_12 {dimension_numbers = #tpu.dot_dimension_numbers<[1], [0], [0], [1], [0, 0, 1, 1], [], []>} : vector<32x128xbf16>, vector<128x128xbf16>, vector<32x128xf32> -> vector<32x128xf32>
    %15 = arith.truncf %14 : vector<32x128xf32> to vector<32x128xbf16>
    %cst_13 = arith.constant dense<0.000000e+00> : vector<32x128xf32>
    %16 = tpu.matmul %0, %15, %cst_13 {dimension_numbers = #tpu.dot_dimension_numbers<[1], [0], [0], [1], [0, 0, 1, 1], [], []>} : vector<32x32xbf16>, vector<32x128xbf16>, vector<32x128xf32> -> vector<32x128xf32>
    %c0_14 = arith.constant 0 : index
    %c0_15 = arith.constant 0 : index
    %c0_16 = arith.constant 0 : index
    %17 = vector.load %arg6[%c0_14, %c0_15, %c0_16] : memref<2x1x128xf32, #tpu.memory_space<vmem>>, vector<1x1x128xf32>
    %18 = vector.shape_cast %17 : vector<1x1x128xf32> to vector<1x128xf32>
    %19 = vector.broadcast %18 : vector<1x128xf32> to vector<32x128xf32>
    %20 = arith.addf %16, %19 : vector<32x128xf32>
    %cst_17 = arith.constant 0.000000e+00 : f32
    %21 = vector.broadcast %cst_17 : f32 to vector<32x128xf32>
    %22 = arith.maximumf %20, %21 : vector<32x128xf32>
    %23 = arith.truncf %22 : vector<32x128xf32> to vector<32x128xbf16>
    %c1 = arith.constant 1 : index
    %c0_18 = arith.constant 0 : index
    %c0_19 = arith.constant 0 : index
    %24 = vector.load %arg5[%c1, %c0_18, %c0_19] : memref<2x128x128xbf16, #tpu.memory_space<vmem>>, vector<1x128x128xbf16>
    %25 = vector.shape_cast %24 : vector<1x128x128xbf16> to vector<128x128xbf16>
    %cst_20 = arith.constant dense<0.000000e+00> : vector<32x128xf32>
    %26 = tpu.matmul %23, %25, %cst_20 {dimension_numbers = #tpu.dot_dimension_numbers<[1], [0], [0], [1], [0, 0, 1, 1], [], []>} : vector<32x128xbf16>, vector<128x128xbf16>, vector<32x128xf32> -> vector<32x128xf32>
    %27 = arith.truncf %26 : vector<32x128xf32> to vector<32x128xbf16>
    %cst_21 = arith.constant dense<0.000000e+00> : vector<32x128xf32>
    %28 = tpu.matmul %0, %27, %cst_21 {dimension_numbers = #tpu.dot_dimension_numbers<[1], [0], [0], [1], [0, 0, 1, 1], [], []>} : vector<32x32xbf16>, vector<32x128xbf16>, vector<32x128xf32> -> vector<32x128xf32>
    %c1_22 = arith.constant 1 : index
    %c0_23 = arith.constant 0 : index
    %c0_24 = arith.constant 0 : index
    %29 = vector.load %arg6[%c1_22, %c0_23, %c0_24] : memref<2x1x128xf32, #tpu.memory_space<vmem>>, vector<1x1x128xf32>
    %30 = vector.shape_cast %29 : vector<1x1x128xf32> to vector<1x128xf32>
    %31 = vector.broadcast %30 : vector<1x128xf32> to vector<32x128xf32>
    %32 = arith.addf %28, %31 : vector<32x128xf32>
    %cst_25 = arith.constant 0.000000e+00 : f32
    %33 = vector.broadcast %cst_25 : f32 to vector<32x128xf32>
    %34 = arith.maximumf %32, %33 : vector<32x128xf32>
    %c0_26 = arith.constant 0 : index
    %c0_27 = arith.constant 0 : index
    %35 = vector.load %arg1[%c0_26, %c0_27] : memref<2x32xf32, #tpu.memory_space<vmem>>, vector<2x32xf32>
    %cst_28 = arith.constant dense<0.000000e+00> : vector<2x128xf32>
    %36 = tpu.matmul %35, %34, %cst_28 {dimension_numbers = #tpu.dot_dimension_numbers<[1], [0], [0], [1], [0, 0, 1, 1], [], []>} : vector<2x32xf32>, vector<32x128xf32>, vector<2x128xf32> -> vector<2x128xf32>
    %37 = arith.truncf %36 : vector<2x128xf32> to vector<2x128xbf16>
    %c0_29 = arith.constant 0 : index
    %c0_30 = arith.constant 0 : index
    %38 = vector.load %arg7[%c0_29, %c0_30] : memref<128x128xbf16, #tpu.memory_space<vmem>>, vector<128x128xbf16>
    %cst_31 = arith.constant dense<0.000000e+00> : vector<2x128xf32>
    %39 = tpu.matmul %37, %38, %cst_31 {dimension_numbers = #tpu.dot_dimension_numbers<[1], [0], [0], [1], [0, 0, 1, 1], [], []>} : vector<2x128xbf16>, vector<128x128xbf16>, vector<2x128xf32> -> vector<2x128xf32>
    %c0_32 = arith.constant 0 : index
    %c0_33 = arith.constant 0 : index
    %40 = vector.load %arg8[%c0_32, %c0_33] : memref<1x128xf32, #tpu.memory_space<vmem>>, vector<1x128xf32>
    %41 = vector.broadcast %40 : vector<1x128xf32> to vector<2x128xf32>
    %42 = arith.addf %39, %41 : vector<2x128xf32>
    %cst_34 = arith.constant 0.000000e+00 : f32
    %43 = vector.broadcast %cst_34 : f32 to vector<2x128xf32>
    %44 = arith.maximumf %42, %43 : vector<2x128xf32>
    %45 = arith.truncf %44 : vector<2x128xf32> to vector<2x128xbf16>
    %c0_35 = arith.constant 0 : index
    %c0_36 = arith.constant 0 : index
    %46 = vector.load %arg9[%c0_35, %c0_36] : memref<128x128xbf16, #tpu.memory_space<vmem>>, vector<128x128xbf16>
    %cst_37 = arith.constant dense<0.000000e+00> : vector<2x128xf32>
    %47 = tpu.matmul %45, %46, %cst_37 {dimension_numbers = #tpu.dot_dimension_numbers<[1], [0], [0], [1], [0, 0, 1, 1], [], []>} : vector<2x128xbf16>, vector<128x128xbf16>, vector<2x128xf32> -> vector<2x128xf32>
    %c0_38 = arith.constant 0 : index
    %c0_39 = arith.constant 0 : index
    %48 = vector.load %arg10[%c0_38, %c0_39] : memref<1x128xf32, #tpu.memory_space<vmem>>, vector<1x128xf32>
    %49 = vector.broadcast %48 : vector<1x128xf32> to vector<2x128xf32>
    %50 = arith.addf %47, %49 : vector<2x128xf32>
    %51 = tpu.iota {dimensions = array<i32: 1>} : vector<2x128xi32>
    %c4_i32 = arith.constant 4 : i32
    %52 = vector.broadcast %c4_i32 : i32 to vector<2x128xi32>
    %53 = arith.cmpi slt, %51, %52 : vector<2x128xi32>
    %cst_40 = arith.constant -1.000000e+30 : f32
    %54 = vector.broadcast %cst_40 : f32 to vector<2x128xf32>
    %55 = arith.select %53, %50, %54 : vector<2x128xi1>, vector<2x128xf32>
    %cst_41 = arith.constant dense<0xFF800000> : vector<2xf32>
    %56 = vector.multi_reduction <maximumf>, %55, %cst_41 [1] : vector<2x128xf32> to vector<2xf32>
    %57 = vector.shape_cast %56 : vector<2xf32> to vector<2x1xf32>
    %58 = vector.broadcast %57 : vector<2x1xf32> to vector<2x128xf32>
    %59 = arith.subf %55, %58 : vector<2x128xf32>
    %60 = math.exp %59 : vector<2x128xf32>
    %cst_42 = arith.constant 0.000000e+00 : f32
    %61 = vector.broadcast %cst_42 : f32 to vector<2x128xf32>
    %62 = arith.select %53, %60, %61 : vector<2x128xi1>, vector<2x128xf32>
    %cst_43 = arith.constant dense<0.000000e+00> : vector<2xf32>
    %63 = vector.multi_reduction <add>, %62, %cst_43 [1] : vector<2x128xf32> to vector<2xf32>
    %64 = vector.shape_cast %63 : vector<2xf32> to vector<2x1xf32>
    %65 = math.log %64 : vector<2x1xf32>
    %66 = arith.addf %57, %65 : vector<2x1xf32>
    %67 = vector.broadcast %66 : vector<2x1xf32> to vector<2x128xf32>
    %68 = arith.subf %55, %67 : vector<2x128xf32>
    %c0_44 = arith.constant 0 : index
    %c0_45 = arith.constant 0 : index
    %69 = vector.load %arg11[%c0_44, %c0_45] : memref<2x128xf32, #tpu.memory_space<vmem>>, vector<2x128xf32>
    tpu.vector_store %arg11[%c0_44, %c0_45], %68 {strides = array<i32>} : memref<2x128xf32, #tpu.memory_space<vmem>>, vector<2x128xf32>,
    return
  }
}

</mosaic_0001>

<llo_original>
// kernel: gcn_forward.1
$region0: #{gcn_forward.1}
  #allocation0 [shape = 'u32[]', space=smem, size = 0x4, offset = 0x4, fixed_abs, tag = 'smem constant byte address 0x4 - core index']
  #allocation1 [shape = 'u32[72,128]{1,0:T(1,128)}', space=vmem, size = 0x9000, scoped, tag = 'internal scratch']
  %s0 = inlined_call_operand.vmem [shape: bf16[32,32], index: 0, kind: input, shape index: {}]
  %s1 = inlined_call_operand.vmem [shape: f32[2,32], index: 1, kind: input, shape index: {}]
  %s2 = inlined_call_operand.vmem [shape: bf16[32,128], index: 2, kind: input, shape index: {}]
  %s3 = inlined_call_operand.vmem [shape: bf16[128,128], index: 3, kind: input, shape index: {}]
  %s4 = inlined_call_operand.vmem [shape: f32[1,128], index: 4, kind: input, shape index: {}]
  %s5 = inlined_call_operand.vmem [shape: bf16[2,128,128], index: 5, kind: input, shape index: {}]
  %s6 = inlined_call_operand.vmem [shape: f32[2,1,128], index: 6, kind: input, shape index: {}]
  %s7 = inlined_call_operand.vmem [shape: bf16[128,128], index: 7, kind: input, shape index: {}]
  %s8 = inlined_call_operand.vmem [shape: f32[1,128], index: 8, kind: input, shape index: {}]
  %s9 = inlined_call_operand.vmem [shape: bf16[128,128], index: 9, kind: input, shape index: {}]
  %s10 = inlined_call_operand.vmem [shape: f32[1,128], index: 10, kind: input, shape index: {}]
  %s11 = inlined_call_operand.hbm [shape: f32[2,128], index: 11, kind: output, shape index: {}]
  %s12 = sld [smem:[#allocation0]]
  $region54: #{gcn_forward.1} parent=0
    _
  %s14 = ssub.s32 1, %s12
  %s15 = scalar_select 0, %s14, %s12
  $region1: #{gcn_forward.1} parent=0
    #allocation2 [shape = 'u8[1024]{0}', space=vmem, size = 0x400, scoped, tag = 'output window, operand 0, single buffered']
    #allocation3 [shape = 's32[1]{0}', space=sflag, size = 0x4, scoped, tag = 'scoped memory for gcn_forward.1']
    %16 = vsyncpa [#allocation3], 0
    // Predicated region
    $region2: #{gcn_forward.1} parent=1 // pred_check
      _
    $region3: #{gcn_forward.1} parent=1 // pred_check_branch
      %18 = sbr.rel (0) target = $region5
    $region4: #{gcn_forward.1} parent=1 // pred_region
      _
    $region5: #{gcn_forward.1} parent=1 // pred_fallthru
      _
    // Predicated region
    $region6: #{gcn_forward.1} parent=1 // pred_check
      _
    $region7: #{gcn_forward.1} parent=1 // pred_check_branch
      %20 = sbr.rel (0) target = $region9
    $region8: #{gcn_forward.1} parent=1 // pred_region
      _
    $region9: #{gcn_forward.1} parent=1 // pred_fallthru
      _
    // Predicated region
    $region10: #{gcn_forward.1} parent=1 // pred_check
      _
    $region11: #{gcn_forward.1} parent=1 // pred_check_branch
      %22 = sbr.rel (0) target = $region13
    $region12: #{gcn_forward.1} parent=1 // pred_region
      _
    $region13: #{gcn_forward.1} parent=1 // pred_fallthru
      _
    // Predicated region
    $region14: #{gcn_forward.1} parent=1 // pred_check
      _
    $region15: #{gcn_forward.1} parent=1 // pred_check_branch
      %24 = sbr.rel (0) target = $region17
    $region16: #{gcn_forward.1} parent=1 // pred_region
      _
    $region17: #{gcn_forward.1} parent=1 // pred_fallthru
      _
    // Predicated region
    $region18: #{gcn_forward.1} parent=1 // pred_check
      _
    $region19: #{gcn_forward.1} parent=1 // pred_check_branch
      %26 = sbr.rel (0) target = $region21
    $region20: #{gcn_forward.1} parent=1 // pred_region
      _
    $region21: #{gcn_forward.1} parent=1 // pred_fallthru
      _
    // Predicated region
    $region22: #{gcn_forward.1} parent=1 // pred_check
      _
    $region23: #{gcn_forward.1} parent=1 // pred_check_branch
      %28 = sbr.rel (0) target = $region25
    $region24: #{gcn_forward.1} parent=1 // pred_region
      _
    $region25: #{gcn_forward.1} parent=1 // pred_fallthru
      _
    // Predicated region
    $region26: #{gcn_forward.1} parent=1 // pred_check
      _
    $region27: #{gcn_forward.1} parent=1 // pred_check_branch
      %30 = sbr.rel (0) target = $region29
    $region28: #{gcn_forward.1} parent=1 // pred_region
      _
    $region29: #{gcn_forward.1} parent=1 // pred_fallthru
      _
    // Predicated region
    $region30: #{gcn_forward.1} parent=1 // pred_check
      _
    $region31: #{gcn_forward.1} parent=1 // pred_check_branch
      %32 = sbr.rel (0) target = $region33
    $region32: #{gcn_forward.1} parent=1 // pred_region
      _
    $region33: #{gcn_forward.1} parent=1 // pred_fallthru
      _
    // Predicated region
    $region34: #{gcn_forward.1} parent=1 // pred_check
      _
    $region35: #{gcn_forward.1} parent=1 // pred_check_branch
      %34 = sbr.rel (0) target = $region37
    $region36: #{gcn_forward.1} parent=1 // pred_region
      _
    $region37: #{gcn_forward.1} parent=1 // pred_fallthru
      _
    // Predicated region
    $region38: #{gcn_forward.1} parent=1 // pred_check
      _
    $region39: #{gcn_forward.1} parent=1 // pred_check_branch
      %36 = sbr.rel (0) target = $region41
    $region40: #{gcn_forward.1} parent=1 // pred_region
      _
    $region41: #{gcn_forward.1} parent=1 // pred_fallthru
      _
    // Predicated region
    $region42: #{gcn_forward.1} parent=1 // pred_check
      _
    $region43: #{gcn_forward.1} parent=1 // pred_check_branch
      %38 = sbr.rel (0) target = $region45
    $region44: #{gcn_forward.1} parent=1 // pred_region
      _
    $region45: #{gcn_forward.1} parent=1 // pred_fallthru
      _
    %v40 = vld [vmem:[%s0] sm:$0xf]
    %v41 = vld [vmem:[%s0 + $0x4] sm:$0xf]
    %v42 = vld [vmem:[%s0 + $0x8] sm:$0xf]
    %v43 = vld [vmem:[%s0 + $0xc] sm:$0xf]
    %v44 = vld [vmem:[%s2] sm:$0xf]
    %v45 = vld [vmem:[%s2 + $0x4] sm:$0xf]
    %v46 = vld [vmem:[%s2 + $0x8] sm:$0xf]
    %v47 = vld [vmem:[%s2 + $0xc] sm:$0xf]
    %v52 = vunpack.c.l.b16 %v40
    %v53 = vunpack.c.l.b16 %v41
    %v54 = vunpack.c.l.b16 %v42
    %v55 = vunpack.c.l.b16 %v43
    %v56 = vpack.c.b16 %v53, %v52
    %v57 = vpack.c.b16 %v55, %v54
    %v62 = vunpack.c.l.b16 %v44
    %v63 = vunpack.c.l.b16 %v45
    %v64 = vunpack.c.l.b16 %v46
    %v65 = vunpack.c.l.b16 %v47
    %v66 = vpack.c.b16 %v63, %v62
    %v67 = vpack.c.b16 %v65, %v64
    %vm70 = vcmask 261120
    %v72 = vsel %vm70, %v56, 0
    %v75 = vsel %vm70, %v57, 0
    %77 = vmatpush.bf16.msra.mxu0 0
    %78 = vmatpush.bf16.msra.mxu0 0
    %79 = vmatpush.bf16.msra.mxu0 0
    %80 = vmatpush.bf16.msra.mxu0 0
    %81 = vmatpush.bf16.msra.mxu0 0
    %82 = vmatpush.bf16.msra.mxu0 0
    %83 = vmatpush.bf16.msra.mxu0 %v67
    %84 = vmatpush.bf16.msra.mxu0 %v66
    %85 = vmatmul.bf16.gmra.mxu0 %v72
    %v86 = vpop.f32.mrf.mxu0
    %v87 = vadd.f32 0.0, %v86
    %v88 = vpop.f32.mrf.mxu0
    %v89 = vadd.f32 0.0, %v88
    %90 = vmatmul.bf16.gmra.mxu0 %v75
    %v91 = vpop.f32.mrf.mxu0
    %v92 = vadd.f32 0.0, %v91
    %v93 = vpop.f32.mrf.mxu0
    %v94 = vadd.f32 0.0, %v93
    %95 = vdwg.mxu0
    %v96 = vpack.c.bf16 %v89, %v87
    %v97 = vpack.c.bf16 %v94, %v92
    %v98 = vld [vmem:[%s3] sm:$0xf]
    %v99 = vld [vmem:[%s3 + $0x4] sm:$0xf]
    %v100 = vld [vmem:[%s3 + $0x8] sm:$0xf]
    %v101 = vld [vmem:[%s3 + $0xc] sm:$0xf]
    %v102 = vld [vmem:[%s3 + $0x10] sm:$0xf]
    %v103 = vld [vmem:[%s3 + $0x14] sm:$0xf]
    %v104 = vld [vmem:[%s3 + $0x18] sm:$0xf]
    %v105 = vld [vmem:[%s3 + $0x1c] sm:$0xf]
    %v106 = vld [vmem:[%s3 + $0x20] sm:$0xf]
    %v107 = vld [vmem:[%s3 + $0x24] sm:$0xf]
    %v108 = vld [vmem:[%s3 + $0x28] sm:$0xf]
    %v109 = vld [vmem:[%s3 + $0x2c] sm:$0xf]
    %v110 = vld [vmem:[%s3 + $0x30] sm:$0xf]
    %v111 = vld [vmem:[%s3 + $0x34] sm:$0xf]
    %v112 = vld [vmem:[%s3 + $0x38] sm:$0xf]
    %v113 = vld [vmem:[%s3 + $0x3c] sm:$0xf]
    %v114 = vld [vmem:[%s4] sm:$0x1]
    %v116 = vperm.slane %v114, 0
    %v134 = vunpack.c.l.b16 %v98
    %v135 = vunpack.c.l.b16 %v99
    %v136 = vunpack.c.l.b16 %v100
    %v137 = vunpack.c.l.b16 %v101
    %v138 = vunpack.c.l.b16 %v102
    %v139 = vunpack.c.l.b16 %v103
    %v140 = vunpack.c.l.b16 %v104
    %v141 = vunpack.c.l.b16 %v105
    %v142 = vunpack.c.l.b16 %v106
    %v143 = vunpack.c.l.b16 %v107
    %v144 = vunpack.c.l.b16 %v108
    %v145 = vunpack.c.l.b16 %v109
    %v146 = vunpack.c.l.b16 %v110
    %v147 = vunpack.c.l.b16 %v111
    %v148 = vunpack.c.l.b16 %v112
    %v149 = vunpack.c.l.b16 %v113
    %v150 = vpack.c.b16 %v135, %v134
    %v151 = vpack.c.b16 %v137, %v136
    %v152 = vpack.c.b16 %v139, %v138
    %v153 = vpack.c.b16 %v141, %v140
    %v154 = vpack.c.b16 %v143, %v142
    %v155 = vpack.c.b16 %v145, %v144
    %v156 = vpack.c.b16 %v147, %v146
    %v157 = vpack.c.b16 %v149, %v148
    %166 = vmatpush.bf16.msra.mxu0 %v157
    %167 = vmatpush.bf16.msra.mxu0 %v156
    %168 = vmatpush.bf16.msra.mxu0 %v155
    %169 = vmatpush.bf16.msra.mxu0 %v154
    %170 = vmatpush.bf16.msra.mxu0 %v153
    %171 = vmatpush.bf16.msra.mxu0 %v152
    %172 = vmatpush.bf16.msra.mxu0 %v151
    %173 = vmatpush.bf16.msra.mxu0 %v150
    %174 = vmatmul.bf16.gmra.mxu0 %v96
    %v175 = vpop.f32.mrf.mxu0
    %v176 = vadd.f32 %v116, %v175
    %v177 = vpop.f32.mrf.mxu0
    %v178 = vadd.f32 %v116, %v177
    %179 = vmatmul.bf16.gmra.mxu0 %v97
    %v180 = vpop.f32.mrf.mxu0
    %v181 = vadd.f32 %v116, %v180
    %v182 = vpop.f32.mrf.mxu0
    %v183 = vadd.f32 %v116, %v182
    %184 = vdwg.mxu0
    %v185 = vmax.f32 %v176, 0.0
    %v186 = vmax.f32 %v178, 0.0
    %v187 = vmax.f32 %v181, 0.0
    %v188 = vmax.f32 %v183, 0.0
    %v189 = vpack.c.bf16 %v186, %v185
    %v190 = vpack.c.bf16 %v188, %v187
    %v191 = vld [vmem:[%s5] sm:$0xf]
    %v192 = vld [vmem:[%s5 + $0x4] sm:$0xf]
    %v193 = vld [vmem:[%s5 + $0x8] sm:$0xf]
    %v194 = vld [vmem:[%s5 + $0xc] sm:$0xf]
    %v195 = vld [vmem:[%s5 + $0x10] sm:$0xf]
    %v196 = vld [vmem:[%s5 + $0x14] sm:$0xf]
    %v197 = vld [vmem:[%s5 + $0x18] sm:$0xf]
    %v198 = vld [vmem:[%s5 + $0x1c] sm:$0xf]
    %v199 = vld [vmem:[%s5 + $0x20] sm:$0xf]
    %v200 = vld [vmem:[%s5 + $0x24] sm:$0xf]
    %v201 = vld [vmem:[%s5 + $0x28] sm:$0xf]
    %v202 = vld [vmem:[%s5 + $0x2c] sm:$0xf]
    %v203 = vld [vmem:[%s5 + $0x30] sm:$0xf]
    %v204 = vld [vmem:[%s5 + $0x34] sm:$0xf]
    %v205 = vld [vmem:[%s5 + $0x38] sm:$0xf]
    %v206 = vld [vmem:[%s5 + $0x3c] sm:$0xf]
    %v223 = vunpack.c.l.b16 %v191
    %v224 = vunpack.c.l.b16 %v192
    %v225 = vunpack.c.l.b16 %v193
    %v226 = vunpack.c.l.b16 %v194
    %v227 = vunpack.c.l.b16 %v195
    %v228 = vunpack.c.l.b16 %v196
    %v229 = vunpack.c.l.b16 %v197
    %v230 = vunpack.c.l.b16 %v198
    %v231 = vunpack.c.l.b16 %v199
    %v232 = vunpack.c.l.b16 %v200
    %v233 = vunpack.c.l.b16 %v201
    %v234 = vunpack.c.l.b16 %v202
    %v235 = vunpack.c.l.b16 %v203
    %v236 = vunpack.c.l.b16 %v204
    %v237 = vunpack.c.l.b16 %v205
    %v238 = vunpack.c.l.b16 %v206
    %v239 = vpack.c.b16 %v224, %v223
    %v240 = vpack.c.b16 %v226, %v225
    %v241 = vpack.c.b16 %v228, %v227
    %v242 = vpack.c.b16 %v230, %v229
    %v243 = vpack.c.b16 %v232, %v231
    %v244 = vpack.c.b16 %v234, %v233
    %v245 = vpack.c.b16 %v236, %v235
    %v246 = vpack.c.b16 %v238, %v237
    %255 = vmatpush.bf16.msra.mxu0 %v246
    %256 = vmatpush.bf16.msra.mxu0 %v245
    %257 = vmatpush.bf16.msra.mxu0 %v244
    %258 = vmatpush.bf16.msra.mxu0 %v243
    %259 = vmatpush.bf16.msra.mxu0 %v242
    %260 = vmatpush.bf16.msra.mxu0 %v241
    %261 = vmatpush.bf16.msra.mxu0 %v240
    %262 = vmatpush.bf16.msra.mxu0 %v239
    %263 = vmatmul.bf16.gmra.mxu0 %v189
    %v264 = vpop.f32.mrf.mxu0
    %v265 = vadd.f32 0.0, %v264
    %v266 = vpop.f32.mrf.mxu0
    %v267 = vadd.f32 0.0, %v266
    %268 = vmatmul.bf16.gmra.mxu0 %v190
    %v269 = vpop.f32.mrf.mxu0
    %v270 = vadd.f32 0.0, %v269
    %v271 = vpop.f32.mrf.mxu0
    %v272 = vadd.f32 0.0, %v271
    %273 = vdwg.mxu0
    %v274 = vpack.c.bf16 %v267, %v265
    %v275 = vpack.c.bf16 %v272, %v270
    %v276 = vld [vmem:[%s6] sm:$0x1]
    %v278 = vperm.slane %v276, 0
    %280 = vmatpush.bf16.msra.mxu0 0
    %281 = vmatpush.bf16.msra.mxu0 0
    %282 = vmatpush.bf16.msra.mxu0 0
    %283 = vmatpush.bf16.msra.mxu0 0
    %284 = vmatpush.bf16.msra.mxu0 0
    %285 = vmatpush.bf16.msra.mxu0 0
    %286 = vmatpush.bf16.msra.mxu0 %v275
    %287 = vmatpush.bf16.msra.mxu0 %v274
    %288 = vmatmul.bf16.gmra.mxu0 %v72
    %v289 = vpop.f32.mrf.mxu0
    %v290 = vadd.f32 %v278, %v289
    %v291 = vpop.f32.mrf.mxu0
    %v292 = vadd.f32 %v278, %v291
    %293 = vmatmul.bf16.gmra.mxu0 %v75
    %v294 = vpop.f32.mrf.mxu0
    %v295 = vadd.f32 %v278, %v294
    %v296 = vpop.f32.mrf.mxu0
    %v297 = vadd.f32 %v278, %v296
    %298 = vdwg.mxu0
    %v299 = vmax.f32 %v290, 0.0
    %v300 = vmax.f32 %v292, 0.0
    %v301 = vmax.f32 %v295, 0.0
    %v302 = vmax.f32 %v297, 0.0
    %v303 = vpack.c.bf16 %v300, %v299
    %v304 = vpack.c.bf16 %v302, %v301
    %s305 = scalar_lea.vmem %s5, 64
    %v306 = vld [vmem:[%s305] sm:$0xf]
    %v307 = vld [vmem:[%s305 + $0x4] sm:$0xf]
    %v308 = vld [vmem:[%s305 + $0x8] sm:$0xf]
    %v309 = vld [vmem:[%s305 + $0xc] sm:$0xf]
    %v310 = vld [vmem:[%s305 + $0x10] sm:$0xf]
    %v311 = vld [vmem:[%s305 + $0x14] sm:$0xf]
    %v312 = vld [vmem:[%s305 + $0x18] sm:$0xf]
    %v313 = vld [vmem:[%s305 + $0x1c] sm:$0xf]
    %v314 = vld [vmem:[%s305 + $0x20] sm:$0xf]
    %v315 = vld [vmem:[%s305 + $0x24] sm:$0xf]
    %v316 = vld [vmem:[%s305 + $0x28] sm:$0xf]
    %v317 = vld [vmem:[%s305 + $0x2c] sm:$0xf]
    %v318 = vld [vmem:[%s305 + $0x30] sm:$0xf]
    %v319 = vld [vmem:[%s305 + $0x34] sm:$0xf]
    %v320 = vld [vmem:[%s305 + $0x38] sm:$0xf]
    %v321 = vld [vmem:[%s305 + $0x3c] sm:$0xf]
    %v338 = vunpack.c.l.b16 %v306
    %v339 = vunpack.c.l.b16 %v307
    %v340 = vunpack.c.l.b16 %v308
    %v341 = vunpack.c.l.b16 %v309
    %v342 = vunpack.c.l.b16 %v310
    %v343 = vunpack.c.l.b16 %v311
    %v344 = vunpack.c.l.b16 %v312
    %v345 = vunpack.c.l.b16 %v313
    %v346 = vunpack.c.l.b16 %v314
    %v347 = vunpack.c.l.b16 %v315
    %v348 = vunpack.c.l.b16 %v316
    %v349 = vunpack.c.l.b16 %v317
    %v350 = vunpack.c.l.b16 %v318
    %v351 = vunpack.c.l.b16 %v319
    %v352 = vunpack.c.l.b16 %v320
    %v353 = vunpack.c.l.b16 %v321
    %v354 = vpack.c.b16 %v339, %v338
    %v355 = vpack.c.b16 %v341, %v340
    %v356 = vpack.c.b16 %v343, %v342
    %v357 = vpack.c.b16 %v345, %v344
    %v358 = vpack.c.b16 %v347, %v346
    %v359 = vpack.c.b16 %v349, %v348
    %v360 = vpack.c.b16 %v351, %v350
    %v361 = vpack.c.b16 %v353, %v352
    %370 = vmatpush.bf16.msra.mxu0 %v361
    %371 = vmatpush.bf16.msra.mxu0 %v360
    %372 = vmatpush.bf16.msra.mxu0 %v359
    %373 = vmatpush.bf16.msra.mxu0 %v358
    %374 = vmatpush.bf16.msra.mxu0 %v357
    %375 = vmatpush.bf16.msra.mxu0 %v356
    %376 = vmatpush.bf16.msra.mxu0 %v355
    %377 = vmatpush.bf16.msra.mxu0 %v354
    %378 = vmatmul.bf16.gmra.mxu0 %v303
    %v379 = vpop.f32.mrf.mxu0
    %v380 = vadd.f32 0.0, %v379
    %v381 = vpop.f32.mrf.mxu0
    %v382 = vadd.f32 0.0, %v381
    %383 = vmatmul.bf16.gmra.mxu0 %v304
    %v384 = vpop.f32.mrf.mxu0
    %v385 = vadd.f32 0.0, %v384
    %v386 = vpop.f32.mrf.mxu0
    %v387 = vadd.f32 0.0, %v386
    %388 = vdwg.mxu0
    %v389 = vpack.c.bf16 %v382, %v380
    %v390 = vpack.c.bf16 %v387, %v385
    %s391 = scalar_lea.vmem %s6, 1
    %v392 = vld [vmem:[%s391] sm:$0x1]
    %v394 = vperm.slane %v392, 0
    %396 = vmatpush.bf16.msra.mxu0 0
    %397 = vmatpush.bf16.msra.mxu0 0
    %398 = vmatpush.bf16.msra.mxu0 0
    %399 = vmatpush.bf16.msra.mxu0 0
    %400 = vmatpush.bf16.msra.mxu0 0
    %401 = vmatpush.bf16.msra.mxu0 0
    %402 = vmatpush.bf16.msra.mxu0 %v390
    %403 = vmatpush.bf16.msra.mxu0 %v389
    %404 = vmatmul.bf16.gmra.mxu0 %v72
    %v405 = vpop.f32.mrf.mxu0
    %v406 = vadd.f32 %v394, %v405
    %v407 = vpop.f32.mrf.mxu0
    %v408 = vadd.f32 %v394, %v407
    %409 = vmatmul.bf16.gmra.mxu0 %v75
    %v410 = vpop.f32.mrf.mxu0
    %v411 = vadd.f32 %v394, %v410
    %v412 = vpop.f32.mrf.mxu0
    %v413 = vadd.f32 %v394, %v412
    %414 = vdwg.mxu0
    %v415 = vmax.f32 %v406, 0.0
    %v416 = vmax.f32 %v408, 0.0
    %v417 = vmax.f32 %v411, 0.0
    %v418 = vmax.f32 %v413, 0.0
    %v419 = vld [vmem:[%s1] sm:$0x3]
    %v421 = vsel %vm70, %v419, 0
    %423 = vmatpush.msra.mxu0 0.0
    %424 = vmatpush.msra.mxu0 0.0
    %425 = vmatpush.msra.mxu0 0.0
    %426 = vmatpush.msra.mxu0 0.0
    %427 = vmatpush.msra.mxu0 0.0
    %428 = vmatpush.msra.mxu0 0.0
    %429 = vmatpush.msra.mxu0 0.0
    %430 = vmatpush.msra.mxu0 0.0
    %431 = vmatpush.msra.mxu0 0.0
    %432 = vmatpush.msra.mxu0 0.0
    %433 = vmatpush.msra.mxu0 0.0
    %434 = vmatpush.msra.mxu0 0.0
    %435 = vmatpush.msra.mxu0 %v418
    %436 = vmatpush.msra.mxu0 %v417
    %437 = vmatpush.msra.mxu0 %v416
    %438 = vmatpush.msra.mxu0 %v415
    %439 = vmatmul.f32.gmra.mxu0 %v421
    %v440 = vpop.f32.mrf.mxu0
    %v441 = vadd.f32 0.0, %v440
    %442 = vdwg.mxu0
    %v443 = vpack.c.bf16 %v441, %v441
    %v444 = vld [vmem:[%s7] sm:$0xf]
    %v445 = vld [vmem:[%s7 + $0x4] sm:$0xf]
    %v446 = vld [vmem:[%s7 + $0x8] sm:$0xf]
    %v447 = vld [vmem:[%s7 + $0xc] sm:$0xf]
    %v448 = vld [vmem:[%s7 + $0x10] sm:$0xf]
    %v449 = vld [vmem:[%s7 + $0x14] sm:$0xf]
    %v450 = vld [vmem:[%s7 + $0x18] sm:$0xf]
    %v451 = vld [vmem:[%s7 + $0x1c] sm:$0xf]
    %v452 = vld [vmem:[%s7 + $0x20] sm:$0xf]
    %v453 = vld [vmem:[%s7 + $0x24] sm:$0xf]
    %v454 = vld [vmem:[%s7 + $0x28] sm:$0xf]
    %v455 = vld [vmem:[%s7 + $0x2c] sm:$0xf]
    %v456 = vld [vmem:[%s7 + $0x30] sm:$0xf]
    %v457 = vld [vmem:[%s7 + $0x34] sm:$0xf]
    %v458 = vld [vmem:[%s7 + $0x38] sm:$0xf]
    %v459 = vld [vmem:[%s7 + $0x3c] sm:$0xf]
    %v460 = vld [vmem:[%s8] sm:$0x1]
    %v462 = vperm.slane %v460, 0
    %v480 = vunpack.c.l.b16 %v444
    %v481 = vunpack.c.l.b16 %v445
    %v482 = vunpack.c.l.b16 %v446
    %v483 = vunpack.c.l.b16 %v447
    %v484 = vunpack.c.l.b16 %v448
    %v485 = vunpack.c.l.b16 %v449
    %v486 = vunpack.c.l.b16 %v450
    %v487 = vunpack.c.l.b16 %v451
    %v488 = vunpack.c.l.b16 %v452
    %v489 = vunpack.c.l.b16 %v453
    %v490 = vunpack.c.l.b16 %v454
    %v491 = vunpack.c.l.b16 %v455
    %v492 = vunpack.c.l.b16 %v456
    %v493 = vunpack.c.l.b16 %v457
    %v494 = vunpack.c.l.b16 %v458
    %v495 = vunpack.c.l.b16 %v459
    %v496 = vpack.c.b16 %v481, %v480
    %v497 = vpack.c.b16 %v483, %v482
    %v498 = vpack.c.b16 %v485, %v484
    %v499 = vpack.c.b16 %v487, %v486
    %v500 = vpack.c.b16 %v489, %v488
    %v501 = vpack.c.b16 %v491, %v490
    %v502 = vpack.c.b16 %v493, %v492
    %v503 = vpack.c.b16 %v495, %v494
    %512 = vmatpush.bf16.msra.mxu0 %v503
    %513 = vmatpush.bf16.msra.mxu0 %v502
    %514 = vmatpush.bf16.msra.mxu0 %v501
    %515 = vmatpush.bf16.msra.mxu0 %v500
    %516 = vmatpush.bf16.msra.mxu0 %v499
    %517 = vmatpush.bf16.msra.mxu0 %v498
    %518 = vmatpush.bf16.msra.mxu0 %v497
    %519 = vmatpush.bf16.msra.mxu0 %v496
    %520 = vmatmul.bf16.gmra.mxu0 %v443
    %v521 = vpop.f32.mrf.mxu0
    %v522 = vadd.f32 %v462, %v521
    %v523 = vpop.f32.mrf.mxu0
    %524 = vdwg.mxu0
    %v525 = vmax.f32 %v522, 0.0
    %v526 = vpack.c.bf16 %v525, %v525
    %v527 = vld [vmem:[%s9] sm:$0xf]
    %v528 = vld [vmem:[%s9 + $0x4] sm:$0xf]
    %v529 = vld [vmem:[%s9 + $0x8] sm:$0xf]
    %v530 = vld [vmem:[%s9 + $0xc] sm:$0xf]
    %v531 = vld [vmem:[%s9 + $0x10] sm:$0xf]
    %v532 = vld [vmem:[%s9 + $0x14] sm:$0xf]
    %v533 = vld [vmem:[%s9 + $0x18] sm:$0xf]
    %v534 = vld [vmem:[%s9 + $0x1c] sm:$0xf]
    %v535 = vld [vmem:[%s9 + $0x20] sm:$0xf]
    %v536 = vld [vmem:[%s9 + $0x24] sm:$0xf]
    %v537 = vld [vmem:[%s9 + $0x28] sm:$0xf]
    %v538 = vld [vmem:[%s9 + $0x2c] sm:$0xf]
    %v539 = vld [vmem:[%s9 + $0x30] sm:$0xf]
    %v540 = vld [vmem:[%s9 + $0x34] sm:$0xf]
    %v541 = vld [vmem:[%s9 + $0x38] sm:$0xf]
    %v542 = vld [vmem:[%s9 + $0x3c] sm:$0xf]
    %v543 = vld [vmem:[%s10] sm:$0x1]
    %v545 = vperm.slane %v543, 0
    %v563 = vunpack.c.l.b16 %v527
    %v564 = vunpack.c.l.b16 %v528
    %v565 = vunpack.c.l.b16 %v529
    %v566 = vunpack.c.l.b16 %v530
    %v567 = vunpack.c.l.b16 %v531
    %v568 = vunpack.c.l.b16 %v532
    %v569 = vunpack.c.l.b16 %v533
    %v570 = vunpack.c.l.b16 %v534
    %v571 = vunpack.c.l.b16 %v535
    %v572 = vunpack.c.l.b16 %v536
    %v573 = vunpack.c.l.b16 %v537
    %v574 = vunpack.c.l.b16 %v538
    %v575 = vunpack.c.l.b16 %v539
    %v576 = vunpack.c.l.b16 %v540
    %v577 = vunpack.c.l.b16 %v541
    %v578 = vunpack.c.l.b16 %v542
    %v579 = vpack.c.b16 %v564, %v563
    %v580 = vpack.c.b16 %v566, %v565
    %v581 = vpack.c.b16 %v568, %v567
    %v582 = vpack.c.b16 %v570, %v569
    %v583 = vpack.c.b16 %v572, %v571
    %v584 = vpack.c.b16 %v574, %v573
    %v585 = vpack.c.b16 %v576, %v575
    %v586 = vpack.c.b16 %v578, %v577
    %595 = vmatpush.bf16.msra.mxu0 %v586
    %596 = vmatpush.bf16.msra.mxu0 %v585
    %597 = vmatpush.bf16.msra.mxu0 %v584
    %598 = vmatpush.bf16.msra.mxu0 %v583
    %599 = vmatpush.bf16.msra.mxu0 %v582
    %600 = vmatpush.bf16.msra.mxu0 %v581
    %601 = vmatpush.bf16.msra.mxu0 %v580
    %602 = vmatpush.bf16.msra.mxu0 %v579
    %603 = vmatmul.bf16.gmra.mxu0 %v526
    %v604 = vpop.f32.mrf.mxu0
    %v605 = vadd.f32 %v545, %v604
    %v606 = vpop.f32.mrf.mxu0
    %607 = vdwg.mxu0
    %v608 = vlaneseq
    %v609 = vand.u32 %v608, 127
    %vm610 = vcmp.lt.s32.totalorder %v609, 4
    %v611 = vsel %vm610, %v605, -1e+30
    %vm612 = vcmask 1041408
    %v613 = vsel %vm612, %v611, -inf
    %614 = vmax.xlane.f32.xlu0 %v613
    %v615 = vpop.xlane.xlu0 %614
    %v616 = vsub.f32 %v611, %v615
    %v617 = vmul.f32 %v616, 1.442695
    %v618 = vpow.pop %v617
    %v619 = vsel %vm610, %v618, 0.0
    %v620 = vsel %vm612, %v619, 0.0
    %621 = vadd.xlane.f32.xlu0 %v620
    %v622 = vpop.xlane.xlu0 %621
    %v623 = vlog2.pop %v622
    %v624 = vmul.f32 %v623, 0.6931472
    %v625 = vadd.f32 %v615, %v624
    %v626 = vsub.f32 %v611, %v625
    %627 = vst [vmem:[#allocation2] sm:$0x3] %v626
    // Predicated region
    $region46: #{gcn_forward.1} parent=1 // pred_check
      _
    $region47: #{gcn_forward.1} parent=1 // pred_check_branch
      %629 = sbr.rel (0) target = $region49
    $region48: #{gcn_forward.1} parent=1 // pred_region
      %631 = vsyncadd [#allocation3], 0
      %s633 = sshll.u32 [#allocation2], 4
      %s634 = int_to_ptr.vmem [resolvable:$true] %s633
      %s635 = sshll.u32 %s11, 4
      %s636 = int_to_ptr.hbm [resolvable:$true] %s635
      %638 = dma.vmem_to_hbm [thread:$0]  %s634, 32, %s636, [#allocation3]
    $region49: #{gcn_forward.1} parent=1 // pred_fallthru
      _
    // Predicated region
    $region50: #{gcn_forward.1} parent=1 // pred_check
      _
    $region51: #{gcn_forward.1} parent=1 // pred_check_branch
      %640 = sbr.rel (0) target = $region53
    $region52: #{gcn_forward.1} parent=1 // pred_region
      %642 = dma.done [#allocation3], 32
    $region53: #{gcn_forward.1} parent=1 // pred_fallthru
      _
    %643 = vsyncpa [#allocation3], 1

</llo_original>
